<compile_context>
chip_gen: v6e
topology: v6e:2x2x1
jax: 0.10.0
libtpu: 0.0.40
codegen_flags: <defaults>
</compile_context>

<pallas_src>
import functools

import jax
import jax.numpy as jnp
from jax.experimental import pallas as pl
from jax.experimental.pallas import tpu as pltpu

_MiB = 1024 * 1024


def _round_up(n, m):
    return ((n + m - 1) // m) * m


def _cdiv(a, b):
    return -(-a // b)


def _vmem_capacity_bytes():
    """Per-core VMEM capacity; conservative (v7x-sized) fallback if the query fails."""
    try:
        cap = getattr(pltpu.get_tpu_info(), "vmem_capacity_bytes", None)
        if cap:
            return int(cap)
    except Exception:
        pass
    return 64 * _MiB


def _resident_spec(shape, index_map):
    """Single-buffered BlockSpec for operands whose index_map is constant."""
    try:
        return pl.BlockSpec(shape, index_map, pipeline_mode=pl.Buffered(1))
    except Exception:  # older jax without pipeline_mode — fall back to default buffering
        return pl.BlockSpec(shape, index_map)


def head_kernel(x_ref, w1_ref, b1_ref, w2_ref, b2_ref, o_ref, acc_ref):
    k = pl.program_id(1)

    @pl.when(k == 0)
    def _():
        acc_ref[...] = jnp.zeros_like(acc_ref)

    # First linear + ReLU (MXU, f32 accumulation).
    h = jnp.dot(x_ref[...], w1_ref[...], preferred_element_type=jnp.float32)
    h = jnp.maximum(h + b1_ref[...], 0.0)            # (tm, ft) + (1, ft) broadcast
    # TODO(synk): dropout omitted — forward implemented in eval mode (identity).

    # Second linear, accumulated over fusion-dim tiles.
    acc_ref[...] += jnp.dot(h.astype(w2_ref.dtype), w2_ref[...],
                            preferred_element_type=jnp.float32)

    @pl.when(k == pl.num_programs(1) - 1)
    def _():
        o_ref[...] = (acc_ref[...] + b2_ref[...]).astype(o_ref.dtype)   # lane-dense store


@functools.partial(jax.jit, static_argnames=("compute_dtype", "tm_cap"))
def head_forward(x, w1, b1, w2, b2, *, compute_dtype=jnp.bfloat16, tm_cap=1024):
    """y = relu(x @ W1 + b1) @ W2 + b2   (weights stored as (in, out))."""
    B, Din = x.shape
    Fdim, Dout = w2.shape[0], w2.shape[1]
    out_dtype = x.dtype

    # Biases stay f32 (the accumulation dtype); streamed operands optionally cast.
    b1 = b1.reshape(1, Fdim).astype(jnp.float32)
    b2 = b2.reshape(1, Dout).astype(jnp.float32)
    if compute_dtype is not None:
        x = x.astype(compute_dtype)
        w1 = w1.astype(compute_dtype)
        w2 = w2.astype(compute_dtype)

    x_isz = x.dtype.itemsize
    w_isz = w1.dtype.itemsize
    o_isz = jnp.dtype(out_dtype).itemsize
    # Packed-sublane quantum: 8 rows for 32-bit, 16 for bf16, 32 for fp8/int8.
    quantum = max(8, 32 // x_isz)

    # Lane-dense output: pad Dout with zero columns. 128 grain for small Dout keeps the
    # padded writeback bounded; 256 grain once Dout >= 128 fills the 256-wide MXU (v6e/v7x).
    grain_out = 256 if Dout >= 128 else 128
    Dout_p = _round_up(Dout, grain_out)
    if Dout_p != Dout:
        w2 = jnp.pad(w2, ((0, 0), (0, Dout_p - Dout)))
        b2 = jnp.pad(b2, ((0, 0), (0, Dout_p - Dout)))

    # ---- generation-aware VMEM budget ---------------------------------------------------
    cap = _vmem_capacity_bytes()                   # ~64 MiB v7x, ~128 MiB v5e/v6e
    vmem_limit = min(int(cap * 0.6), 96 * _MiB)    # ~38 MiB on v7x, ~76 MiB on v5e/v6e
    budget = int(vmem_limit * 0.7)                 # headroom for compiler scratch/spills

    # ---- fusion-dim tiling (only when both weights can't sit resident) ------------------
    def _slice_bytes(ft, nbuf):
        # W1 slice + b1 slice (f32) + W2 slice, nbuf-buffered; b2 single-buffered f32.
        return nbuf * ((Din * ft + ft * Dout_p) * w_isz + ft * 4) + Dout_p * 4

    f_tile, kt = Fdim, 1
    if _slice_bytes(Fdim, 1) > budget // 2:
        grain_f = 256 if Fdim % 256 == 0 else (128 if Fdim % 128 == 0 else None)
        if grain_f is not None:
            while (f_tile % 2 == 0 and (f_tile // 2) % grain_f == 0
                   and _slice_bytes(f_tile, 2) > budget // 2):
                f_tile //= 2
            kt = Fdim // f_tile
    weight_bytes = _slice_bytes(f_tile, 1 if kt == 1 else 2)

    # ---- batch tile from the remaining budget --------------------------------------------
    per_row = (2 * Din * x_isz          # x, double-buffered
               + 2 * Dout_p * o_isz     # out, double-buffered
               + Dout_p * 4             # f32 accumulator scratch
               + f_tile * 4)            # f32 intermediate h
    tm = max(quantum, (budget - weight_bytes) // per_row)
    tm = max(quantum, (min(tm, tm_cap) // quantum) * quantum)

    Bq = _round_up(B, quantum)          # pad B only to the sublane quantum (low waste)
    tm = min(tm, Bq)
    nb = _cdiv(Bq, tm)
    if nb == 1 and Bq >= 512:           # give the 'parallel' axis work for both v7x TCs
        nb = 2
    tm = _round_up(_cdiv(Bq, nb), quantum)
    Bp = nb * tm
    if Bp != B:
        x = jnp.pad(x, ((0, Bp - B), (0, 0)))

    # Advisory cost estimate from the padded problem and post-cast dtypes.
    flops = 2 * Bp * (Din * Fdim + Fdim * Dout_p)
    w_stream = 1 if kt == 1 else nb     # tiled weights are re-streamed per batch tile
    bytes_accessed = (Bp * Din * x_isz
                      + w_stream * (Din * Fdim + Fdim * Dout_p) * w_isz
                      + w_stream * Fdim * 4 + Dout_p * 4
                      + Bp * Dout_p * o_isz)

    if kt == 1:
        # Fully resident weights: constant index_map -> single-buffered.
        w1_spec = _resident_spec((Din, f_tile), lambda i, k: (0, 0))
        b1_spec = _resident_spec((1, f_tile), lambda i, k: (0, 0))
        w2_spec = _resident_spec((f_tile, Dout_p), lambda i, k: (0, 0))
    else:
        # F-tiled: slices change with k -> default double-buffering.
        w1_spec = pl.BlockSpec((Din, f_tile), lambda i, k: (0, k))
        b1_spec = pl.BlockSpec((1, f_tile), lambda i, k: (0, k))
        w2_spec = pl.BlockSpec((f_tile, Dout_p), lambda i, k: (k, 0))
    b2_spec = _resident_spec((1, Dout_p), lambda i, k: (0, 0))

    out = pl.pallas_call(
        head_kernel,
        out_shape=jax.ShapeDtypeStruct((Bp, Dout_p), out_dtype),
        grid_spec=pltpu.PrefetchScalarGridSpec(
            num_scalar_prefetch=0,
            grid=(nb, kt),
            in_specs=[
                pl.BlockSpec((tm, Din), lambda i, k: (i, 0)),   # x tile over batch
                w1_spec, b1_spec, w2_spec, b2_spec,
            ],
            out_specs=pl.BlockSpec((tm, Dout_p), lambda i, k: (i, 0)),
            scratch_shapes=[pltpu.VMEM((tm, Dout_p), jnp.float32)],
        ),
        compiler_params=pltpu.CompilerParams(
            dimension_semantics=("parallel", "arbitrary"),
            vmem_limit_bytes=vmem_limit,
        ),
        cost_estimate=pl.CostEstimate(
            flops=flops, transcendentals=0, bytes_accessed=bytes_accessed),
    )(x, w1, b1, w2, b2)

    return out[:B, :Dout]


def init_head_params(key, input_dims, fusion_dim, output_dims, dtype=jnp.float32):
    """Deterministic init matching nn.Linear's U(-1/sqrt(fan_in), 1/sqrt(fan_in)).

    Weights are stored already transposed: (in_features, out_features).
    """
    k1, k2, k3, k4 = jax.random.split(key, 4)
    bound1 = 1.0 / jnp.sqrt(input_dims)
    bound2 = 1.0 / jnp.sqrt(fusion_dim)
    w1 = jax.random.uniform(k1, (input_dims, fusion_dim), dtype, -bound1, bound1)
    b1 = jax.random.uniform(k2, (1, fusion_dim), dtype, -bound1, bound1)
    w2 = jax.random.uniform(k3, (fusion_dim, output_dims), dtype, -bound2, bound2)
    b2 = jax.random.uniform(k4, (1, output_dims), dtype, -bound2, bound2)
    return w1, b1, w2, b2


def _ref(x, w1, b1, w2, b2):
    return jnp.maximum(x @ w1 + b1, 0.0) @ w2 + b2


if __name__ == "__main__":
    # Small shapes consistent with the module's forward:
    #   batch=8, input_dims=32, fusion_dim=64, output_dims=16
    B, INPUT_DIMS, FUSION_DIM, OUTPUT_DIMS = 8, 32, 64, 16

    key = jax.random.PRNGKey(0)
    kx, kp = jax.random.split(key)
    x = jax.random.normal(kx, (B, INPUT_DIMS), jnp.float32)
    w1, b1, w2, b2 = init_head_params(kp, INPUT_DIMS, FUSION_DIM, OUTPUT_DIMS)
    ref = _ref(x, w1, b1, w2, b2)

    # Default path (bf16 streamed operands, f32 accumulation) — looser tolerance.
    out = jax.block_until_ready(head_forward(x, w1, b1, w2, b2))
    assert out.shape == (B, OUTPUT_DIMS), out.shape
    assert jnp.allclose(out, ref, atol=5e-2, rtol=5e-2), "bf16 mismatch vs reference"

    # Exact f32 path — tight tolerance.
    out_f32 = jax.block_until_ready(
        head_forward(x, w1, b1, w2, b2, compute_dtype=jnp.float32))
    assert jnp.allclose(out_f32, ref, atol=1e-5, rtol=1e-5), "f32 mismatch vs reference"

    # Ragged batch (not a multiple of the sublane quantum) exercises the padding path.
    xr = jax.random.normal(kx, (B + 5, INPUT_DIMS), jnp.float32)
    out_r = jax.block_until_ready(head_forward(xr, w1, b1, w2, b2))
    ref_r = _ref(xr, w1, b1, w2, b2)
    assert out_r.shape == (B + 5, OUTPUT_DIMS), out_r.shape
    assert jnp.allclose(out_r, ref_r, atol=5e-2, rtol=5e-2), "ragged mismatch vs reference"

    print("KERNEL_OK")
</pallas_src>

<mosaic_0001>
module attributes {stable_mosaic.version = 11 : i64} {
  func.func @head_kernel(%arg0: i32, %arg1: i32, %arg2: memref<16x32xbf16, #tpu.memory_space<vmem>>, %arg3: memref<32x64xbf16, #tpu.memory_space<vmem>>, %arg4: memref<1x64xf32, #tpu.memory_space<vmem>>, %arg5: memref<64x128xbf16, #tpu.memory_space<vmem>>, %arg6: memref<1x128xf32, #tpu.memory_space<vmem>>, %arg7: memref<16x128xf32, #tpu.memory_space<vmem>>, %arg8: memref<16x128xf32, #tpu.memory_space<vmem>>) attributes {dimension_semantics = [#tpu.dimension_semantics<parallel>, #tpu.dimension_semantics<arbitrary>], iteration_bounds = array<i64: 1, 1>, scalar_prefetch = 0 : i64, scratch_operands = 1 : i64, tpu.core_type = #tpu.core_type<tc>, window_params = [{transform_indices = @transform_0, window_bounds = array<i64: 16, 32>}, {pipeline_mode = #tpu.pipeline_mode<synchronous>, transform_indices = @transform_1, window_bounds = array<i64: 32, 64>}, {pipeline_mode = #tpu.pipeline_mode<synchronous>, transform_indices = @transform_2, window_bounds = array<i64: 1, 64>}, {pipeline_mode = #tpu.pipeline_mode<synchronous>, transform_indices = @transform_3, window_bounds = array<i64: 64, 128>}, {pipeline_mode = #tpu.pipeline_mode<synchronous>, transform_indices = @transform_4, window_bounds = array<i64: 1, 128>}, {transform_indices = @transform_5, window_bounds = array<i64: 16, 128>}]} {
    %c0_i32 = arith.constant 0 : i32
    %0 = arith.cmpi eq, %arg1, %c0_i32 : i32
    %1 = arith.extui %0 : i1 to i32
    %c0_i32_0 = arith.constant 0 : i32
    %2 = arith.cmpi ne, %1, %c0_i32_0 : i32
    scf.if %2 {
      %cst_16 = arith.constant 0.000000e+00 : f32
      %20 = vector.broadcast %cst_16 : f32 to vector<16x128xf32>
      %c0_17 = arith.constant 0 : index
      %c0_18 = arith.constant 0 : index
      %21 = vector.load %arg8[%c0_17, %c0_18] : memref<16x128xf32, #tpu.memory_space<vmem>>, vector<16x128xf32>
      tpu.vector_store %arg8[%c0_17, %c0_18], %20 {strides = array<i32>} : memref<16x128xf32, #tpu.memory_space<vmem>>, vector<16x128xf32>,
    } else {
    }
    %c0 = arith.constant 0 : index
    %c0_1 = arith.constant 0 : index
    %3 = vector.load %arg2[%c0, %c0_1] : memref<16x32xbf16, #tpu.memory_space<vmem>>, vector<16x32xbf16>
    %c0_2 = arith.constant 0 : index
    %c0_3 = arith.constant 0 : index
    %4 = vector.load %arg3[%c0_2, %c0_3] : memref<32x64xbf16, #tpu.memory_space<vmem>>, vector<32x64xbf16>
    %cst = arith.constant dense<0.000000e+00> : vector<16x64xf32>
    %5 = tpu.matmul %3, %4, %cst {dimension_numbers = #tpu.dot_dimension_numbers<[1], [0], [0], [1], [0, 0, 1, 1], [], []>} : vector<16x32xbf16>, vector<32x64xbf16>, vector<16x64xf32> -> vector<16x64xf32>
    %c0_4 = arith.constant 0 : index
    %c0_5 = arith.constant 0 : index
    %6 = vector.load %arg4[%c0_4, %c0_5] : memref<1x64xf32, #tpu.memory_space<vmem>>, vector<1x64xf32>
    %7 = vector.broadcast %6 : vector<1x64xf32> to vector<16x64xf32>
    %8 = arith.addf %5, %7 : vector<16x64xf32>
    %cst_6 = arith.constant 0.000000e+00 : f32
    %9 = vector.broadcast %cst_6 : f32 to vector<16x64xf32>
    %10 = arith.maximumf %8, %9 : vector<16x64xf32>
    %c0_7 = arith.constant 0 : index
    %c0_8 = arith.constant 0 : index
    %11 = vector.load %arg8[%c0_7, %c0_8] : memref<16x128xf32, #tpu.memory_space<vmem>>, vector<16x128xf32>
    %12 = arith.truncf %10 : vector<16x64xf32> to vector<16x64xbf16>
    %c0_9 = arith.constant 0 : index
    %c0_10 = arith.constant 0 : index
    %13 = vector.load %arg5[%c0_9, %c0_10] : memref<64x128xbf16, #tpu.memory_space<vmem>>, vector<64x128xbf16>
    %cst_11 = arith.constant dense<0.000000e+00> : vector<16x128xf32>
    %14 = tpu.matmul %12, %13, %cst_11 {dimension_numbers = #tpu.dot_dimension_numbers<[1], [0], [0], [1], [0, 0, 1, 1], [], []>} : vector<16x64xbf16>, vector<64x128xbf16>, vector<16x128xf32> -> vector<16x128xf32>
    %15 = arith.addf %11, %14 : vector<16x128xf32>
    %c0_12 = arith.constant 0 : index
    %c0_13 = arith.constant 0 : index
    %16 = vector.load %arg8[%c0_12, %c0_13] : memref<16x128xf32, #tpu.memory_space<vmem>>, vector<16x128xf32>
    tpu.vector_store %arg8[%c0_12, %c0_13], %15 {strides = array<i32>} : memref<16x128xf32, #tpu.memory_space<vmem>>, vector<16x128xf32>,
    %c0_i32_14 = arith.constant 0 : i32
    %17 = arith.cmpi eq, %arg1, %c0_i32_14 : i32
    %18 = arith.extui %17 : i1 to i32
    %c0_i32_15 = arith.constant 0 : i32
    %19 = arith.cmpi ne, %18, %c0_i32_15 : i32
    scf.if %19 {
      %c0_16 = arith.constant 0 : index
      %c0_17 = arith.constant 0 : index
      %20 = vector.load %arg8[%c0_16, %c0_17] : memref<16x128xf32, #tpu.memory_space<vmem>>, vector<16x128xf32>
      %c0_18 = arith.constant 0 : index
      %c0_19 = arith.constant 0 : index
      %21 = vector.load %arg6[%c0_18, %c0_19] : memref<1x128xf32, #tpu.memory_space<vmem>>, vector<1x128xf32>
      %22 = vector.broadcast %21 : vector<1x128xf32> to vector<16x128xf32>
      %23 = arith.addf %20, %22 : vector<16x128xf32>
      %c0_20 = arith.constant 0 : index
      %c0_21 = arith.constant 0 : index
      %24 = vector.load %arg7[%c0_20, %c0_21] : memref<16x128xf32, #tpu.memory_space<vmem>>, vector<16x128xf32>
      tpu.vector_store %arg7[%c0_20, %c0_21], %23 {strides = array<i32>} : memref<16x128xf32, #tpu.memory_space<vmem>>, vector<16x128xf32>,
    } else {
    }
    return
  }
  func.func @transform_0(%arg0: i32, %arg1: i32) -> (i32, i32) {
    %c0_i32 = arith.constant 0 : i32
    %c0_i32_0 = arith.constant 0 : i32
    return %arg0, %c0_i32 : i32, i32
  }
  func.func @transform_1(%arg0: i32, %arg1: i32) -> (i32, i32) {
    %c0_i32 = arith.constant 0 : i32
    %c0_i32_0 = arith.constant 0 : i32
    %c0_i32_1 = arith.constant 0 : i32
    return %c0_i32, %c0_i32_0 : i32, i32
  }
  func.func @transform_2(%arg0: i32, %arg1: i32) -> (i32, i32) {
    %c0_i32 = arith.constant 0 : i32
    %c0_i32_0 = arith.constant 0 : i32
    %c0_i32_1 = arith.constant 0 : i32
    return %c0_i32, %c0_i32_0 : i32, i32
  }
  func.func @transform_3(%arg0: i32, %arg1: i32) -> (i32, i32) {
    %c0_i32 = arith.constant 0 : i32
    %c0_i32_0 = arith.constant 0 : i32
    %c0_i32_1 = arith.constant 0 : i32
    return %c0_i32, %c0_i32_0 : i32, i32
  }
  func.func @transform_4(%arg0: i32, %arg1: i32) -> (i32, i32) {
    %c0_i32 = arith.constant 0 : i32
    %c0_i32_0 = arith.constant 0 : i32
    %c0_i32_1 = arith.constant 0 : i32
    return %c0_i32, %c0_i32_0 : i32, i32
  }
  func.func @transform_5(%arg0: i32, %arg1: i32) -> (i32, i32) {
    %c0_i32 = arith.constant 0 : i32
    %c0_i32_0 = arith.constant 0 : i32
    return %arg0, %c0_i32 : i32, i32
  }
}

</mosaic_0001>

<llo_original>
// kernel: head_forward.1
$region0: #{head_forward.1}
  #allocation0 [shape = 'u32[]', space=smem, size = 0x4, offset = 0x4, fixed_abs, tag = 'smem constant byte address 0x4 - core index']
  #allocation1 [shape = 'u32[144,128]{1,0:T(1,128)}', space=vmem, size = 0x12000, scoped, tag = 'internal scratch']
  #allocation2 [shape = 'f32[16,128]{1,0:T(8,128)}', space=vmem, size = 0x2000, scoped, tag = 'scratch operand']
  %s0 = inlined_call_operand.vmem [shape: bf16[16,32], index: 0, kind: input, shape index: {}]
  %s1 = inlined_call_operand.vmem [shape: bf16[32,64], index: 1, kind: input, shape index: {}]
  %s2 = inlined_call_operand.vmem [shape: f32[1,64], index: 2, kind: input, shape index: {}]
  %s3 = inlined_call_operand.vmem [shape: bf16[64,128], index: 3, kind: input, shape index: {}]
  %s4 = inlined_call_operand.vmem [shape: f32[1,128], index: 4, kind: input, shape index: {}]
  %s5 = inlined_call_operand.vmem [shape: f32[16,128], index: 5, kind: output, shape index: {}]
  %s6 = sld [smem:[#allocation0]]
  $region38: #{head_forward.1} parent=0
    _
  %s8 = ssub.s32 1, %s6
  %s9 = scalar_select 0, %s8, %s6
  // Predicated region
  $region2: #{head_forward.1} parent=0 // pred_check
    _
  $region3: #{head_forward.1} parent=0 // pred_check_branch
    %11 = sbr.rel (0) target = $region5
  $region4: #{head_forward.1} parent=0 // pred_region
    _
  $region5: #{head_forward.1} parent=0 // pred_fallthru
    _
  // Predicated region
  $region6: #{head_forward.1} parent=0 // pred_check
    _
  $region7: #{head_forward.1} parent=0 // pred_check_branch
    %13 = sbr.rel (0) target = $region9
  $region8: #{head_forward.1} parent=0 // pred_region
    _
  $region9: #{head_forward.1} parent=0 // pred_fallthru
    _
  // Predicated region
  $region10: #{head_forward.1} parent=0 // pred_check
    _
  $region11: #{head_forward.1} parent=0 // pred_check_branch
    %15 = sbr.rel (0) target = $region13
  $region12: #{head_forward.1} parent=0 // pred_region
    _
  $region13: #{head_forward.1} parent=0 // pred_fallthru
    _
  // Predicated region
  $region14: #{head_forward.1} parent=0 // pred_check
    _
  $region15: #{head_forward.1} parent=0 // pred_check_branch
    %17 = sbr.rel (0) target = $region17
  $region16: #{head_forward.1} parent=0 // pred_region
    _
  $region17: #{head_forward.1} parent=0 // pred_fallthru
    _
  // Predicated region
  $region18: #{head_forward.1} parent=0 // pred_check
    _
  $region19: #{head_forward.1} parent=0 // pred_check_branch
    %19 = sbr.rel (0) target = $region21
  $region20: #{head_forward.1} parent=0 // pred_region
    _
  $region21: #{head_forward.1} parent=0 // pred_fallthru
    _
  %p21 = scmp.eq.s32.totalorder 0, 0
  // Predicated region
  $region22: #{head_forward.1} parent=0 // pred_check
    %p22 = pneg %p21
  $region23: #{head_forward.1} parent=0 // pred_check_branch
    %24 = sbr.rel (%p22) target = $region25
  $region24: #{head_forward.1} parent=0 // pred_region
    %25 = vst [vmem:[#allocation2] sm:$0xff] 0.0
    %26 = vst [vmem:[#allocation2 + $0x8] sm:$0xff] 0.0
  $region25: #{head_forward.1} parent=0 // pred_fallthru
    _
  %v27 = vld [vmem:[%s0] sm:$0xf]
  %v28 = vld [vmem:[%s0 + $0x4] sm:$0xf]
  %v29 = vld [vmem:[%s1] sm:$0xf]
  %v30 = vld [vmem:[%s1 + $0x4] sm:$0xf]
  %v31 = vld [vmem:[%s1 + $0x8] sm:$0xf]
  %v32 = vld [vmem:[%s1 + $0xc] sm:$0xf]
  %v33 = vld [vmem:[%s2] sm:$0x1]
  %v35 = vlaneseq
  %v36 = vshrl.u32 %v35, 7
  %v37 = vsub.s32 0, %v36
  %v38 = vrot.slane %v33, %v37
  %v42 = vunpack.c.l.b16 %v27
  %v43 = vunpack.c.l.b16 %v28
  %v44 = vpack.c.b16 %v43, %v42
  %v49 = vunpack.c.l.b16 %v29
  %v50 = vunpack.c.l.b16 %v30
  %v51 = vunpack.c.l.b16 %v31
  %v52 = vunpack.c.l.b16 %v32
  %v53 = vpack.c.b16 %v50, %v49
  %v54 = vpack.c.b16 %v52, %v51
  %vm57 = vcmask 261120
  %v59 = vsel %vm57, %v44, 0
  %61 = vmatprep.subr.bf16.mxu0 0
  %62 = vmatpush1.bf16.msra.mxu0 0
  %63 = vmatprep.subr.bf16.mxu0 0
  %64 = vmatpush1.bf16.msra.mxu0 0
  %65 = vmatprep.subr.bf16.mxu0 0
  %66 = vmatpush1.bf16.msra.mxu0 0
  %67 = vmatprep.subr.bf16.mxu0 0
  %68 = vmatpush1.bf16.msra.mxu0 0
  %69 = vmatprep.subr.bf16.mxu0 0
  %70 = vmatpush1.bf16.msra.mxu0 0
  %71 = vmatprep.subr.bf16.mxu0 0
  %72 = vmatpush1.bf16.msra.mxu0 0
  %73 = vmatprep.subr.bf16.mxu0 0
  %74 = vmatpush1.bf16.msra.mxu0 %v54
  %75 = vmatprep.subr.bf16.mxu0 0
  %76 = vmatpush1.bf16.msra.mxu0 %v53
  %77 = vmatprep.subr.bf16.mxu0 0
  %78 = vmatpush2.bf16.msra.mxu0 0
  %79 = vmatprep.subr.bf16.mxu0 0
  %80 = vmatpush2.bf16.msra.mxu0 0
  %81 = vmatprep.subr.bf16.mxu0 0
  %82 = vmatpush2.bf16.msra.mxu0 0
  %83 = vmatprep.subr.bf16.mxu0 0
  %84 = vmatpush2.bf16.msra.mxu0 0
  %85 = vmatprep.subr.bf16.mxu0 0
  %86 = vmatpush2.bf16.msra.mxu0 0
  %87 = vmatprep.subr.bf16.mxu0 0
  %88 = vmatpush2.bf16.msra.mxu0 0
  %89 = vmatprep.subr.bf16.mxu0 0
  %90 = vmatpush2.bf16.msra.mxu0 0
  %91 = vmatprep.subr.bf16.mxu0 0
  %92 = vmatpush2.bf16.msra.mxu0 0
  %93 = vmatprep.mubr.bf16.mxu0 0
  %94 = vmatmul.mubr.bf16.gmra.mxu0 %v59
  %v95 = vpop.f32.mrf.mxu0
  %v96 = vadd.f32 %v38, %v95
  %v97 = vpop.f32.mrf.mxu0
  %v98 = vpop.f32.mrf.mxu0
  %v99 = vadd.f32 %v38, %v98
  %v100 = vpop.f32.mrf.mxu0
  %101 = vdwg.mxu0
  %v102 = vmax.f32 %v96, 0.0
  %v103 = vmax.f32 %v99, 0.0
  %v104 = vld [vmem:[#allocation2] sm:$0xff]
  %v105 = vld [vmem:[#allocation2 + $0x8] sm:$0xff]
  %v106 = vpack.c.bf16 %v103, %v102
  %v107 = vld [vmem:[%s3] sm:$0xf]
  %v108 = vld [vmem:[%s3 + $0x4] sm:$0xf]
  %v109 = vld [vmem:[%s3 + $0x8] sm:$0xf]
  %v110 = vld [vmem:[%s3 + $0xc] sm:$0xf]
  %v111 = vld [vmem:[%s3 + $0x10] sm:$0xf]
  %v112 = vld [vmem:[%s3 + $0x14] sm:$0xf]
  %v113 = vld [vmem:[%s3 + $0x18] sm:$0xf]
  %v114 = vld [vmem:[%s3 + $0x1c] sm:$0xf]
  %v123 = vunpack.c.l.b16 %v107
  %v124 = vunpack.c.l.b16 %v108
  %v125 = vunpack.c.l.b16 %v109
  %v126 = vunpack.c.l.b16 %v110
  %v127 = vunpack.c.l.b16 %v111
  %v128 = vunpack.c.l.b16 %v112
  %v129 = vunpack.c.l.b16 %v113
  %v130 = vunpack.c.l.b16 %v114
  %v131 = vpack.c.b16 %v124, %v123
  %v132 = vpack.c.b16 %v126, %v125
  %v133 = vpack.c.b16 %v128, %v127
  %v134 = vpack.c.b16 %v130, %v129
  %vm139 = vcmask 523264
  %v141 = vsel %vm139, %v106, 0
  %143 = vmatprep.subr.bf16.mxu0 0
  %144 = vmatpush1.bf16.msra.mxu0 0
  %145 = vmatprep.subr.bf16.mxu0 0
  %146 = vmatpush1.bf16.msra.mxu0 0
  %147 = vmatprep.subr.bf16.mxu0 0
  %148 = vmatpush1.bf16.msra.mxu0 0
  %149 = vmatprep.subr.bf16.mxu0 0
  %150 = vmatpush1.bf16.msra.mxu0 0
  %151 = vmatprep.subr.bf16.mxu0 0
  %152 = vmatpush1.bf16.msra.mxu0 %v134
  %153 = vmatprep.subr.bf16.mxu0 0
  %154 = vmatpush1.bf16.msra.mxu0 %v133
  %155 = vmatprep.subr.bf16.mxu0 0
  %156 = vmatpush1.bf16.msra.mxu0 %v132
  %157 = vmatprep.subr.bf16.mxu0 0
  %158 = vmatpush1.bf16.msra.mxu0 %v131
  %159 = vmatprep.subr.bf16.mxu0 0
  %160 = vmatpush2.bf16.msra.mxu0 0
  %161 = vmatprep.subr.bf16.mxu0 0
  %162 = vmatpush2.bf16.msra.mxu0 0
  %163 = vmatprep.subr.bf16.mxu0 0
  %164 = vmatpush2.bf16.msra.mxu0 0
  %165 = vmatprep.subr.bf16.mxu0 0
  %166 = vmatpush2.bf16.msra.mxu0 0
  %167 = vmatprep.subr.bf16.mxu0 0
  %168 = vmatpush2.bf16.msra.mxu0 0
  %169 = vmatprep.subr.bf16.mxu0 0
  %170 = vmatpush2.bf16.msra.mxu0 0
  %171 = vmatprep.subr.bf16.mxu0 0
  %172 = vmatpush2.bf16.msra.mxu0 0
  %173 = vmatprep.subr.bf16.mxu0 0
  %174 = vmatpush2.bf16.msra.mxu0 0
  %175 = vmatprep.mubr.bf16.mxu0 0
  %176 = vmatmul.mubr.bf16.gmra.mxu0 %v141
  %v177 = vpop.f32.mrf.mxu0
  %v178 = vadd.f32 0.0, %v177
  %v179 = vpop.f32.mrf.mxu0
  %v180 = vpop.f32.mrf.mxu0
  %v181 = vadd.f32 0.0, %v180
  %v182 = vpop.f32.mrf.mxu0
  %183 = vdwg.mxu0
  %v184 = vadd.f32 %v104, %v178
  %v185 = vadd.f32 %v105, %v181
  %186 = vst [vmem:[#allocation2] sm:$0xff] %v184
  %187 = vst [vmem:[#allocation2 + $0x8] sm:$0xff] %v185
  // Predicated region
  $region26: #{head_forward.1} parent=0 // pred_check
    %p188 = pneg %p21
  $region27: #{head_forward.1} parent=0 // pred_check_branch
    %190 = sbr.rel (%p188) target = $region29
  $region28: #{head_forward.1} parent=0 // pred_region
    %v191 = vld [vmem:[#allocation2] sm:$0xff]
    %v192 = vld [vmem:[#allocation2 + $0x8] sm:$0xff]
    %v193 = vld [vmem:[%s4] sm:$0x1]
    %v195 = vlaneseq
    %v196 = vshrl.u32 %v195, 7
    %v197 = vsub.s32 0, %v196
    %v198 = vrot.slane %v193, %v197
    %v200 = vadd.f32 %v191, %v198
    %v201 = vadd.f32 %v192, %v198
    %202 = vst [vmem:[%s5] sm:$0xff] %v200
    %203 = vst [vmem:[%s5 + $0x8] sm:$0xff] %v201
  $region29: #{head_forward.1} parent=0 // pred_fallthru
    _
  // Predicated region
  $region30: #{head_forward.1} parent=0 // pred_check
    _
  $region31: #{head_forward.1} parent=0 // pred_check_branch
    %205 = sbr.rel (0) target = $region33
  $region32: #{head_forward.1} parent=0 // pred_region
    _
  $region33: #{head_forward.1} parent=0 // pred_fallthru
    _
  // Predicated region
  $region34: #{head_forward.1} parent=0 // pred_check
    _
  $region35: #{head_forward.1} parent=0 // pred_check_branch
    %207 = sbr.rel (0) target = $region37
  $region36: #{head_forward.1} parent=0 // pred_region
    _
  $region37: #{head_forward.1} parent=0 // pred_fallthru
    _

</llo_original>
